<compile_context>
chip_gen: v7x
topology: tpu7x:2x2x1
jax: 0.10.0
libtpu: 0.0.40
codegen_flags: <defaults>
</compile_context>

<pallas_src>
import functools

import jax
import jax.numpy as jnp
from jax.experimental import pallas as pl
from jax.experimental.pallas import tpu as pltpu

LANES = 128                # lane width
SUBLANES = 8               # sublane tile
DEFAULT_TILE_ROWS = 1024   # (1024, 128) f32 = 512 KiB per input block
NUM_SHARDS = 2             # v7x has 2 TensorCores; no-op on v5e/v6e


def _dice_sums_kernel(x_ref, t_ref, o_ref, *, tile_rows, tiles_per_shard,
                      total_tiles, n_valid):
    """Accumulates [intersection, sum(pred), sum(target)] lane-wise partials.

    x_ref, t_ref: (tile_rows, 128) tiles of logits / targets (native dtype).
    o_ref: (1, 3, 8, 128) f32 output block, VMEM-resident across the
           sequential tile axis of the current shard (used as accumulator).
    """
    s = pl.program_id(0)            # shard index (parallel axis)
    j = pl.program_id(1)            # tile index within shard (reduction axis)
    b = s * tiles_per_shard + j     # logical global tile index (may overflow)

    @pl.when(j == 0)
    def _init():
        o_ref[...] = jnp.zeros_like(o_ref)

    xv = x_ref[...].astype(jnp.float32)
    tv = t_ref[...].astype(jnp.float32)

    # Mask out the zero-padded / ragged tail and fully-out-of-range duplicate
    # tiles (clamped index_map) of the last shard.
    # NOTE: int32 flat index limits this kernel to < 2**31 elements.
    row = jax.lax.broadcasted_iota(jnp.int32, (tile_rows, LANES), 0)
    lane = jax.lax.broadcasted_iota(jnp.int32, (tile_rows, LANES), 1)
    flat = b * (tile_rows * LANES) + row * LANES + lane
    mask = flat < n_valid

    pred = jnp.where(mask, jax.nn.sigmoid(xv), 0.0)   # VPU + EUP, masked
    tgt = jnp.where(mask, tv, 0.0)

    def fold(v):  # (tile_rows, 128) -> (8, 128) via pure VPU vreg adds
        return v.reshape(tile_rows // SUBLANES, SUBLANES, LANES).sum(axis=0)

    o_ref[0, 0] += fold(pred * tgt)   # intersection partials
    o_ref[0, 1] += fold(pred)         # sum(pred) partials
    o_ref[0, 2] += fold(tgt)          # sum(target) partials


def dice_loss(x, target):
    """1 - dice_coef(sigmoid(x).ravel(), target.ravel())."""
    assert x.shape[0] == target.shape[0], "Prediction and GT batch size do not match"

    # Keep native (possibly narrow) dtypes; cast to f32 inside the kernel.
    if target.dtype == jnp.bool_:
        target = target.astype(jnp.bfloat16)

    xf = x.reshape(-1)
    tf = target.reshape(-1)
    n = xf.shape[0]

    chunk = SUBLANES * LANES                     # 1024
    n_pad = (-n) % chunk
    if n_pad:
        # Rare path (n not a multiple of 1024): pad with zeros; padded
        # elements are masked inside the kernel so values are irrelevant.
        xf = jnp.pad(xf, (0, n_pad))
        tf = jnp.pad(tf, (0, n_pad))

    rows = (n + n_pad) // LANES                  # multiple of 8
    x2 = xf.reshape(rows, LANES)                 # free reshape (contiguous)
    t2 = tf.reshape(rows, LANES)

    tile_rows = rows if rows <= DEFAULT_TILE_ROWS else DEFAULT_TILE_ROWS
    total_tiles = pl.cdiv(rows, tile_rows)
    num_shards = min(NUM_SHARDS, total_tiles)
    tiles_per_shard = pl.cdiv(total_tiles, num_shards)

    # Clamp so the DMA never walks past the array; out-of-range duplicate
    # tiles are fully masked inside the kernel (zero contribution).
    def in_index_map(s, j):
        return (jnp.minimum(s * tiles_per_shard + j, total_tiles - 1), 0)

    kernel = functools.partial(
        _dice_sums_kernel,
        tile_rows=tile_rows,
        tiles_per_shard=tiles_per_shard,
        total_tiles=total_tiles,
        n_valid=n,
    )

    partials = pl.pallas_call(
        kernel,
        out_shape=jax.ShapeDtypeStruct(
            (num_shards, 3, SUBLANES, LANES), jnp.float32),
        grid_spec=pltpu.PrefetchScalarGridSpec(
            num_scalar_prefetch=0,
            grid=(num_shards, tiles_per_shard),
            in_specs=[
                pl.BlockSpec((tile_rows, LANES), in_index_map),
                pl.BlockSpec((tile_rows, LANES), in_index_map),
            ],
            out_specs=pl.BlockSpec((1, 3, SUBLANES, LANES),
                                   lambda s, j: (s, 0, 0, 0)),
        ),
        compiler_params=pltpu.CompilerParams(
            dimension_semantics=("parallel", "arbitrary")),
    )(x2, t2)

    # Tiny epilogue reduce in plain JAX: (num_shards, 3, 8, 128) -> (3,)
    sums = jnp.sum(partials, axis=(0, 2, 3))
    intersection = sums[0]
    union = sums[1] + sums[2]
    dice = 2.0 * intersection / (union + intersection)
    return 1.0 - dice


def _reference(x, target):
    pred = jax.nn.sigmoid(x.astype(jnp.float32)).reshape(-1)
    tgt = target.astype(jnp.float32).reshape(-1)
    inter = jnp.sum(pred * tgt)
    union = jnp.sum(pred) + jnp.sum(tgt)
    return 1.0 - 2.0 * inter / (union + inter)


if __name__ == "__main__":
    key = jax.random.PRNGKey(0)
    k1, k2, k3, k4 = jax.random.split(key, 4)

    # input: [N, num_classes, H, W] logits; target: same shape, binary mask.
    x = jax.random.normal(k1, (2, 4, 16, 16), dtype=jnp.float32)
    target = (jax.random.uniform(k2, (2, 4, 16, 16)) > 0.5).astype(jnp.float32)

    loss = jax.block_until_ready(dice_loss(x, target))
    loss_ref = _reference(x, target)
    assert jnp.allclose(loss, loss_ref, rtol=1e-5, atol=1e-6), (loss, loss_ref)

    # Second check: ragged size exercising pad, multi-tile, 2 shards and the
    # clamped-duplicate-tile path.
    x2 = jax.random.normal(k3, (2, 4, 255, 129), dtype=jnp.float32)
    target2 = (jax.random.uniform(k4, (2, 4, 255, 129)) > 0.5).astype(jnp.float32)

    loss2 = jax.block_until_ready(dice_loss(x2, target2))
    loss2_ref = _reference(x2, target2)
    assert jnp.allclose(loss2, loss2_ref, rtol=1e-4, atol=1e-6), (loss2, loss2_ref)

    print("KERNEL_OK")
</pallas_src>

<mosaic_0001>
module attributes {stable_mosaic.version = 11 : i64} {
  func.func @_dice_sums_kernel(%arg0: i32, %arg1: i32, %arg2: memref<16x128xf32, #tpu.memory_space<vmem>>, %arg3: memref<16x128xf32, #tpu.memory_space<vmem>>, %arg4: memref<1x3x8x128xf32, #tpu.memory_space<vmem>>) attributes {dimension_semantics = [#tpu.dimension_semantics<parallel>, #tpu.dimension_semantics<arbitrary>], iteration_bounds = array<i64: 1, 1>, scalar_prefetch = 0 : i64, scratch_operands = 0 : i64, tpu.core_type = #tpu.core_type<tc>, window_params = [{transform_indices = @transform_0, window_bounds = array<i64: 16, 128>}, {transform_indices = @transform_1, window_bounds = array<i64: 16, 128>}, {transform_indices = @transform_2, window_bounds = array<i64: 1, 3, 8, 128>}]} {
    %c1_i32 = arith.constant 1 : i32
    %0 = arith.muli %arg0, %c1_i32 : i32
    %1 = arith.addi %0, %arg1 : i32
    %c0_i32 = arith.constant 0 : i32
    %2 = arith.cmpi eq, %arg1, %c0_i32 : i32
    %3 = arith.extui %2 : i1 to i32
    %c0_i32_0 = arith.constant 0 : i32
    %4 = arith.cmpi ne, %3, %c0_i32_0 : i32
    scf.if %4 {
      %cst_32 = arith.constant 0.000000e+00 : f32
      %51 = vector.broadcast %cst_32 : f32 to vector<1x3x8x128xf32>
      %c0_33 = arith.constant 0 : index
      %c0_34 = arith.constant 0 : index
      %c0_35 = arith.constant 0 : index
      %c0_36 = arith.constant 0 : index
      %52 = vector.load %arg4[%c0_33, %c0_34, %c0_35, %c0_36] : memref<1x3x8x128xf32, #tpu.memory_space<vmem>>, vector<1x3x8x128xf32>
      tpu.vector_store %arg4[%c0_33, %c0_34, %c0_35, %c0_36], %51 {strides = array<i32>} : memref<1x3x8x128xf32, #tpu.memory_space<vmem>>, vector<1x3x8x128xf32>,
    } else {
    }
    %c0 = arith.constant 0 : index
    %c0_1 = arith.constant 0 : index
    %5 = vector.load %arg2[%c0, %c0_1] : memref<16x128xf32, #tpu.memory_space<vmem>>, vector<16x128xf32>
    %c0_2 = arith.constant 0 : index
    %c0_3 = arith.constant 0 : index
    %6 = vector.load %arg3[%c0_2, %c0_3] : memref<16x128xf32, #tpu.memory_space<vmem>>, vector<16x128xf32>
    %7 = tpu.iota {dimensions = array<i32: 0>} : vector<16x128xi32>
    %8 = tpu.iota {dimensions = array<i32: 1>} : vector<16x128xi32>
    %c2048_i32 = arith.constant 2048 : i32
    %9 = arith.muli %1, %c2048_i32 : i32
    %c128_i32 = arith.constant 128 : i32
    %10 = vector.broadcast %c128_i32 : i32 to vector<16x128xi32>
    %11 = arith.muli %7, %10 : vector<16x128xi32>
    %12 = vector.broadcast %9 : i32 to vector<16x128xi32>
    %13 = arith.addi %12, %11 : vector<16x128xi32>
    %14 = arith.addi %13, %8 : vector<16x128xi32>
    %c2048_i32_4 = arith.constant 2048 : i32
    %15 = vector.broadcast %c2048_i32_4 : i32 to vector<16x128xi32>
    %16 = arith.cmpi slt, %14, %15 : vector<16x128xi32>
    %17 = arith.negf %5 : vector<16x128xf32>
    %18 = math.exp %17 : vector<16x128xf32>
    %cst = arith.constant 1.000000e+00 : f32
    %19 = vector.broadcast %cst : f32 to vector<16x128xf32>
    %20 = arith.addf %19, %18 : vector<16x128xf32>
    %21 = arith.divf %19, %20 : vector<16x128xf32>
    %cst_5 = arith.constant 0.000000e+00 : f32
    %22 = vector.broadcast %cst_5 : f32 to vector<16x128xf32>
    %23 = arith.select %16, %21, %22 : vector<16x128xi1>, vector<16x128xf32>
    %cst_6 = arith.constant 0.000000e+00 : f32
    %24 = vector.broadcast %cst_6 : f32 to vector<16x128xf32>
    %25 = arith.select %16, %6, %24 : vector<16x128xi1>, vector<16x128xf32>
    %c0_7 = arith.constant 0 : index
    %c0_8 = arith.constant 0 : index
    %c0_9 = arith.constant 0 : index
    %c0_10 = arith.constant 0 : index
    %26 = vector.load %arg4[%c0_7, %c0_8, %c0_9, %c0_10] : memref<1x3x8x128xf32, #tpu.memory_space<vmem>>, vector<1x1x8x128xf32>
    %27 = vector.shape_cast %26 : vector<1x1x8x128xf32> to vector<8x128xf32>
    %28 = arith.mulf %23, %25 : vector<16x128xf32>
    %29 = vector.shape_cast %28 : vector<16x128xf32> to vector<2x8x128xf32>
    %cst_11 = arith.constant dense<0.000000e+00> : vector<8x128xf32>
    %30 = vector.multi_reduction <add>, %29, %cst_11 [0] : vector<2x8x128xf32> to vector<8x128xf32>
    %31 = arith.addf %27, %30 : vector<8x128xf32>
    %c0_12 = arith.constant 0 : index
    %c0_13 = arith.constant 0 : index
    %c0_14 = arith.constant 0 : index
    %c0_15 = arith.constant 0 : index
    %32 = vector.load %arg4[%c0_12, %c0_13, %c0_14, %c0_15] : memref<1x3x8x128xf32, #tpu.memory_space<vmem>>, vector<1x1x8x128xf32>
    %33 = vector.shape_cast %32 : vector<1x1x8x128xf32> to vector<8x128xf32>
    %34 = vector.shape_cast %31 : vector<8x128xf32> to vector<1x1x8x128xf32>
    tpu.vector_store %arg4[%c0_12, %c0_13, %c0_14, %c0_15], %34 {strides = array<i32>} : memref<1x3x8x128xf32, #tpu.memory_space<vmem>>, vector<1x1x8x128xf32>,
    %c0_16 = arith.constant 0 : index
    %c1 = arith.constant 1 : index
    %c0_17 = arith.constant 0 : index
    %c0_18 = arith.constant 0 : index
    %35 = vector.load %arg4[%c0_16, %c1, %c0_17, %c0_18] : memref<1x3x8x128xf32, #tpu.memory_space<vmem>>, vector<1x1x8x128xf32>
    %36 = vector.shape_cast %35 : vector<1x1x8x128xf32> to vector<8x128xf32>
    %37 = vector.shape_cast %23 : vector<16x128xf32> to vector<2x8x128xf32>
    %cst_19 = arith.constant dense<0.000000e+00> : vector<8x128xf32>
    %38 = vector.multi_reduction <add>, %37, %cst_19 [0] : vector<2x8x128xf32> to vector<8x128xf32>
    %39 = arith.addf %36, %38 : vector<8x128xf32>
    %c0_20 = arith.constant 0 : index
    %c1_21 = arith.constant 1 : index
    %c0_22 = arith.constant 0 : index
    %c0_23 = arith.constant 0 : index
    %40 = vector.load %arg4[%c0_20, %c1_21, %c0_22, %c0_23] : memref<1x3x8x128xf32, #tpu.memory_space<vmem>>, vector<1x1x8x128xf32>
    %41 = vector.shape_cast %40 : vector<1x1x8x128xf32> to vector<8x128xf32>
    %42 = vector.shape_cast %39 : vector<8x128xf32> to vector<1x1x8x128xf32>
    tpu.vector_store %arg4[%c0_20, %c1_21, %c0_22, %c0_23], %42 {strides = array<i32>} : memref<1x3x8x128xf32, #tpu.memory_space<vmem>>, vector<1x1x8x128xf32>,
    %c0_24 = arith.constant 0 : index
    %c2 = arith.constant 2 : index
    %c0_25 = arith.constant 0 : index
    %c0_26 = arith.constant 0 : index
    %43 = vector.load %arg4[%c0_24, %c2, %c0_25, %c0_26] : memref<1x3x8x128xf32, #tpu.memory_space<vmem>>, vector<1x1x8x128xf32>
    %44 = vector.shape_cast %43 : vector<1x1x8x128xf32> to vector<8x128xf32>
    %45 = vector.shape_cast %25 : vector<16x128xf32> to vector<2x8x128xf32>
    %cst_27 = arith.constant dense<0.000000e+00> : vector<8x128xf32>
    %46 = vector.multi_reduction <add>, %45, %cst_27 [0] : vector<2x8x128xf32> to vector<8x128xf32>
    %47 = arith.addf %44, %46 : vector<8x128xf32>
    %c0_28 = arith.constant 0 : index
    %c2_29 = arith.constant 2 : index
    %c0_30 = arith.constant 0 : index
    %c0_31 = arith.constant 0 : index
    %48 = vector.load %arg4[%c0_28, %c2_29, %c0_30, %c0_31] : memref<1x3x8x128xf32, #tpu.memory_space<vmem>>, vector<1x1x8x128xf32>
    %49 = vector.shape_cast %48 : vector<1x1x8x128xf32> to vector<8x128xf32>
    %50 = vector.shape_cast %47 : vector<8x128xf32> to vector<1x1x8x128xf32>
    tpu.vector_store %arg4[%c0_28, %c2_29, %c0_30, %c0_31], %50 {strides = array<i32>} : memref<1x3x8x128xf32, #tpu.memory_space<vmem>>, vector<1x1x8x128xf32>,
    return
  }
  func.func @transform_0(%arg0: i32, %arg1: i32) -> (i32, i32) {
    %c1_i32 = arith.constant 1 : i32
    %0 = arith.muli %arg0, %c1_i32 : i32
    %1 = arith.addi %0, %arg1 : i32
    %c0_i32 = arith.constant 0 : i32
    %2 = arith.minsi %1, %c0_i32 : i32
    %c0_i32_0 = arith.constant 0 : i32
    %c0_i32_1 = arith.constant 0 : i32
    return %2, %c0_i32_0 : i32, i32
  }
  func.func @transform_1(%arg0: i32, %arg1: i32) -> (i32, i32) {
    %c1_i32 = arith.constant 1 : i32
    %0 = arith.muli %arg0, %c1_i32 : i32
    %1 = arith.addi %0, %arg1 : i32
    %c0_i32 = arith.constant 0 : i32
    %2 = arith.minsi %1, %c0_i32 : i32
    %c0_i32_0 = arith.constant 0 : i32
    %c0_i32_1 = arith.constant 0 : i32
    return %2, %c0_i32_0 : i32, i32
  }
  func.func @transform_2(%arg0: i32, %arg1: i32) -> (i32, i32, i32, i32) {
    %c0_i32 = arith.constant 0 : i32
    %c0_i32_0 = arith.constant 0 : i32
    %c0_i32_1 = arith.constant 0 : i32
    %c0_i32_2 = arith.constant 0 : i32
    return %arg0, %c0_i32, %c0_i32_0, %c0_i32_1 : i32, i32, i32, i32
  }
}

</mosaic_0001>

<llo_original>
// kernel: tpu_custom_call.1
$region0: #{tpu_custom_call.1}
  #allocation0 [shape = 'u32[]', space=smem, size = 0x4, offset = 0x4, fixed_abs, tag = 'smem constant byte address 0x4 - core index']
  #allocation1 [shape = 'u32[144,128]{1,0:T(1,128)}', space=vmem, size = 0x12000, scoped, tag = 'internal scratch']
  %s0 = inlined_call_operand.hbm [shape: f32[16,128], index: 0, kind: input, shape index: {}]
  %s1 = inlined_call_operand.hbm [shape: f32[16,128], index: 1, kind: input, shape index: {}]
  %s2 = inlined_call_operand.hbm [shape: f32[1,3,8,128], index: 2, kind: output, shape index: {}]
  %s3 = sld [smem:[#allocation0]]
  $region30: #{tpu_custom_call.1} parent=0
    _
  %s5 = ssub.s32 1, %s3
  %s6 = scalar_select 0, %s5, %s3
  $region1: #{tpu_custom_call.1} parent=0
    #allocation2 [shape = 'u8[8192]{0}', space=vmem, size = 0x2000, scoped, tag = 'input window, operand 0, single buffered']
    #allocation3 [shape = 's32[1]{0}', space=sflag, size = 0x4, scoped, tag = 'scoped memory for tpu_custom_call.1']
    #allocation4 [shape = 's32[1]{0}', space=sflag, size = 0x4, scoped, tag = 'scoped memory for tpu_custom_call.1']
    #allocation5 [shape = 'u8[8192]{0}', space=vmem, size = 0x2000, scoped, tag = 'input window, operand 1, single buffered']
    #allocation6 [shape = 's32[1]{0}', space=sflag, size = 0x4, scoped, tag = 'scoped memory for tpu_custom_call.1']
    #allocation7 [shape = 'u8[12288]{0}', space=vmem, size = 0x3000, scoped, tag = 'output window, operand 0, single buffered']
    %7 = vsyncpa [#allocation3], 0
    %8 = vsyncpa [#allocation6], 0
    %9 = vsyncpa [#allocation4], 0
    // Predicated region
    $region2: #{tpu_custom_call.1} parent=1 // pred_check
      _
    $region3: #{tpu_custom_call.1} parent=1 // pred_check_branch
      %11 = sbr.rel (0) target = $region5
    $region4: #{tpu_custom_call.1} parent=1 // pred_region
      %s12 = sadd.s32 0, 0
      %p13 = scmp.lt.s32.totalorder %s12, 0
      %s14 = scalar_select %p13, %s12, 0
      %s15 = smul.u32 2, %s14
      %s17 = ssub.s32 256, 256
      %18 = vsyncadd [#allocation3], %s17
      %s19 = smul.addr %s15, 128
      %s20 = scalar_lea.hbm %s0, %s19
      %s21 = sshll.u32 [#allocation2], 4
      %s22 = int_to_ptr.vmem [resolvable:$true] %s21
      %27 = dma.hbm_to_vmem [thread:$0]  %s20, 256, %s22, [#allocation3], 128, 128, 8
    $region5: #{tpu_custom_call.1} parent=1 // pred_fallthru
      _
    // Predicated region
    $region6: #{tpu_custom_call.1} parent=1 // pred_check
      _
    $region7: #{tpu_custom_call.1} parent=1 // pred_check_branch
      %29 = sbr.rel (0) target = $region9
    $region8: #{tpu_custom_call.1} parent=1 // pred_region
      %s30 = sadd.s32 0, 0
      %p31 = scmp.lt.s32.totalorder %s30, 0
      %s32 = scalar_select %p31, %s30, 0
      %s33 = smul.u32 2, %s32
      %s35 = ssub.s32 256, 256
      %36 = vsyncadd [#allocation6], %s35
      %s37 = smul.addr %s33, 128
      %s38 = scalar_lea.hbm %s1, %s37
      %s39 = sshll.u32 [#allocation5], 4
      %s40 = int_to_ptr.vmem [resolvable:$true] %s39
      %45 = dma.hbm_to_vmem [thread:$0]  %s38, 256, %s40, [#allocation6], 128, 128, 8
    $region9: #{tpu_custom_call.1} parent=1 // pred_fallthru
      _
    // Predicated region
    $region10: #{tpu_custom_call.1} parent=1 // pred_check
      _
    $region11: #{tpu_custom_call.1} parent=1 // pred_check_branch
      %47 = sbr.rel (0) target = $region13
    $region12: #{tpu_custom_call.1} parent=1 // pred_region
      %48 = dma.done [#allocation3], 256
    $region13: #{tpu_custom_call.1} parent=1 // pred_fallthru
      _
    // Predicated region
    $region14: #{tpu_custom_call.1} parent=1 // pred_check
      _
    $region15: #{tpu_custom_call.1} parent=1 // pred_check_branch
      %50 = sbr.rel (0) target = $region17
    $region16: #{tpu_custom_call.1} parent=1 // pred_region
      %51 = dma.done [#allocation6], 256
    $region17: #{tpu_custom_call.1} parent=1 // pred_fallthru
      _
    %s52 = sadd.s32 0, 0
    %p53 = scmp.lt.s32.totalorder %s52, 0
    %s54 = scalar_select %p53, %s52, 0
    %s55 = smul.u32 2, %s54
    %s56 = sadd.s32 0, 0
    %p57 = scmp.lt.s32.totalorder %s56, 0
    %s58 = scalar_select %p57, %s56, 0
    %s59 = smul.u32 2, %s58
    %s60 = sadd.s32 0, 0
    %p61 = scmp.eq.s32.totalorder 0, 0
    // Predicated region
    $region18: #{tpu_custom_call.1} parent=1 // pred_check
      %p62 = pneg %p61
    $region19: #{tpu_custom_call.1} parent=1 // pred_check_branch
      %64 = sbr.rel (%p62) target = $region21
    $region20: #{tpu_custom_call.1} parent=1 // pred_region
      %65 = vst [vmem:[#allocation7] sm:$0xff] 0.0
      %66 = vst [vmem:[#allocation7 + $0x8] sm:$0xff] 0.0
      %67 = vst [vmem:[#allocation7 + $0x10] sm:$0xff] 0.0
    $region21: #{tpu_custom_call.1} parent=1 // pred_fallthru
      _
    %v68 = vld [vmem:[#allocation2] sm:$0xff]
    %v69 = vld [vmem:[#allocation2 + $0x8] sm:$0xff]
    %v70 = vld [vmem:[#allocation5] sm:$0xff]
    %v71 = vld [vmem:[#allocation5 + $0x8] sm:$0xff]
    %v72 = vlaneseq
    %v73 = vshrl.u32 %v72, 7
    %v74 = vadd.s32 %v73, 8
    %v75 = vlaneseq
    %v76 = vand.u32 %v75, 127
    %s77 = smul.u32 %s60, 2048
    %v78 = vmul.u32 %v73, 128
    %v79 = vmul.u32 %v74, 128
    %v80 = vstv %s77
    %v81 = vadd.s32 %v80, %v78
    %v82 = vadd.s32 %v80, %v79
    %v83 = vadd.s32 %v81, %v76
    %v84 = vadd.s32 %v82, %v76
    %vm85 = vcmp.lt.s32.totalorder %v83, 2048
    %vm86 = vcmp.lt.s32.totalorder %v84, 2048
    %v87 = vxor.u32 %v68, 2147483648
    %v88 = vxor.u32 %v69, 2147483648
    %v89 = vmul.f32 %v87, 1.442695
    %v90 = vpow.pop %v89
    %v91 = vmul.f32 %v88, 1.442695
    %v92 = vpow.pop %v91
    %v93 = vadd.f32 %v90, 1.0
    %v94 = vadd.f32 %v92, 1.0
    %v95 = vrcp.pop %v93
    %v96 = vmul.f32 1.0, %v95
    %v97 = vrcp.pop %v94
    %v98 = vmul.f32 1.0, %v97
    %v99 = vsel %vm85, %v96, 0.0
    %v100 = vsel %vm86, %v98, 0.0
    %v101 = vsel %vm85, %v70, 0.0
    %v102 = vsel %vm86, %v71, 0.0
    %v103 = vld [vmem:[#allocation7] sm:$0xff]
    %v104 = vmul.f32 %v99, %v101
    %v105 = vmul.f32 %v100, %v102
    %v106 = vadd.f32 %v104, %v105
    %v107 = vadd.f32 %v103, %v106
    %108 = vst [vmem:[#allocation7] sm:$0xff] %v107
    %s109 = scalar_lea.vmem [#allocation7], 8
    %v110 = vld [vmem:[%s109] sm:$0xff]
    %v111 = vadd.f32 %v99, %v100
    %v112 = vadd.f32 %v110, %v111
    %113 = vst [vmem:[%s109] sm:$0xff] %v112
    %s114 = scalar_lea.vmem [#allocation7], 16
    %v115 = vld [vmem:[%s114] sm:$0xff]
    %v116 = vadd.f32 %v101, %v102
    %v117 = vadd.f32 %v115, %v116
    %118 = vst [vmem:[%s114] sm:$0xff] %v117
    // Predicated region
    $region22: #{tpu_custom_call.1} parent=1 // pred_check
      _
    $region23: #{tpu_custom_call.1} parent=1 // pred_check_branch
      %120 = sbr.rel (0) target = $region25
    $region24: #{tpu_custom_call.1} parent=1 // pred_region
      %s122 = ssub.s32 384, 384
      %123 = vsyncadd [#allocation4], %s122
      %s124 = sshll.u32 [#allocation7], 4
      %s125 = int_to_ptr.vmem [resolvable:$true] %s124
      %130 = dma.vmem_to_hbm [thread:$0]  %s125, 384, %s2, [#allocation4], 128, 128, 8
    $region25: #{tpu_custom_call.1} parent=1 // pred_fallthru
      _
    // Predicated region
    $region26: #{tpu_custom_call.1} parent=1 // pred_check
      _
    $region27: #{tpu_custom_call.1} parent=1 // pred_check_branch
      %132 = sbr.rel (0) target = $region29
    $region28: #{tpu_custom_call.1} parent=1 // pred_region
      %133 = dma.done [#allocation4], 384
    $region29: #{tpu_custom_call.1} parent=1 // pred_fallthru
      _
    %134 = vsyncpa [#allocation3], 1
    %135 = vsyncpa [#allocation6], 1
    %136 = vsyncpa [#allocation4], 1

</llo_original>
